<compile_context>
chip_gen: v7x
topology: tpu7x:2x2x1
jax: 0.10.0
libtpu: 0.0.40
codegen_flags: <defaults>
</compile_context>

<pallas_src>
import functools

import jax
import jax.numpy as jnp
from jax.experimental import pallas as pl
from jax.experimental.pallas import tpu as pltpu

HIDDEN = 512          # nn.Linear(z_dim, 512) hidden width (128-aligned)
LANE = 128
SUBLANE = 8
TM_CAP = 4096         # upper bound on the batch tile
VMEM_DATA_BUDGET = 40 * 1024 * 1024   # data budget used to size tm (fits v7x's 64 MiB/TC)
VMEM_LIMIT_BYTES = 48 * 1024 * 1024   # scoped VMEM limit handed to Mosaic


def _round_up(n, m):
    return ((n + m - 1) // m) * m


def decoder_kernel(z_ref, w1_ref, b1_ref, w2_ref, b2_ref, out_ref):
    # z_ref : (TM, Z)  f32      w1_ref: (Z, H)  bf16   b1_ref: (1, H)  f32
    # w2_ref: (H, Xp)  bf16     b2_ref: (1, Xp) f32    out_ref:(TM, Xp) f32
    z = z_ref[...].astype(w1_ref.dtype)                    # cast to bf16 in-kernel
    h = jnp.dot(z, w1_ref[...], preferred_element_type=jnp.float32)   # MXU, f32 acc
    h = jnp.maximum(h + b1_ref[...], 0.0)                  # bias + ReLU in f32 (VPU)
    y = jnp.dot(h.astype(w2_ref.dtype), w2_ref[...],
                preferred_element_type=jnp.float32)        # MXU, f32 acc
    out_ref[...] = (y + b2_ref[...]).astype(out_ref.dtype)


def prepare_decoder_params(w1, b1, w2, b2):
    """One-time parameter prep (do NOT call per forward):
    cast weights to bf16 and zero-pad the output feature dim to a lane-dense
    multiple of 128 (lane-dense output stores; padding contributes 0 to dots).
    Weights are stored as (in_features, out_features) so the kernel computes
    z @ W + b, matching nn.Linear's x @ W^T + b."""
    z_dim, hidden = w1.shape
    hidden2, x_dim = w2.shape
    assert hidden == HIDDEN and hidden2 == HIDDEN
    xp = _round_up(x_dim, LANE)
    w1_p = w1.astype(jnp.bfloat16)
    b1_p = b1.reshape(1, hidden).astype(jnp.float32)
    w2_p = jnp.zeros((hidden, xp), jnp.bfloat16).at[:, :x_dim].set(
        w2.astype(jnp.bfloat16))
    b2_p = jnp.zeros((1, xp), jnp.float32).at[:, :x_dim].set(
        b2.reshape(1, x_dim).astype(jnp.float32))
    return w1_p, b1_p, w2_p, b2_p, x_dim


def _tile_batch(B, z_dim, xp):
    """Pick (tm, n_tiles) from a VMEM budget: double-buffered f32 z tile,
    double-buffered f32 output tile, f32 hidden activation, resident weights."""
    per_row = 2 * z_dim * 4 + 2 * xp * 4 + HIDDEN * 4
    resident = z_dim * HIDDEN * 2 + HIDDEN * xp * 2 + HIDDEN * 4 + xp * 4
    tm_budget = (VMEM_DATA_BUDGET - resident) // per_row
    tm_budget = max(SUBLANE, min(TM_CAP, (tm_budget // SUBLANE) * SUBLANE))
    n_tiles = pl.cdiv(B, tm_budget)
    if B >= 2 * SUBLANE and n_tiles < 2:
        n_tiles = 2          # >=2 grid steps so v7x megacore shards the batch
    tm = _round_up(pl.cdiv(B, n_tiles), SUBLANE)
    return tm, n_tiles


@functools.partial(jax.jit, static_argnames=("x_dim",))
def decoder_forward(z, w1_p, b1_p, w2_p, b2_p, *, x_dim):
    """z: (B, z_dim) f32; prepared params from prepare_decoder_params.
    Returns (B, x_dim) f32."""
    B, z_dim = z.shape
    hidden, xp = w2_p.shape
    assert w1_p.shape == (z_dim, hidden)

    tm, n_tiles = _tile_batch(B, z_dim, xp)
    b_pad = tm * n_tiles

    # Pad batch rows only when the grid doesn't divide B exactly.
    z_in = z if b_pad == B else jnp.zeros((b_pad, z_dim), z.dtype).at[:B].set(z)

    flops = 2 * b_pad * (z_dim * hidden + hidden * xp)
    bytes_accessed = (b_pad * z_dim * 4                      # f32 z
                      + w1_p.size * 2 + w2_p.size * 2        # bf16 weights
                      + b1_p.size * 4 + b2_p.size * 4        # f32 biases
                      + b_pad * xp * 4)                      # f32 output

    out_padded = pl.pallas_call(
        decoder_kernel,
        out_shape=jax.ShapeDtypeStruct((b_pad, xp), jnp.float32),
        grid_spec=pltpu.PrefetchScalarGridSpec(
            num_scalar_prefetch=0,
            grid=(n_tiles,),
            in_specs=[
                pl.BlockSpec((tm, z_dim), lambda i: (i, 0)),      # z tile (full-extent last dim)
                pl.BlockSpec((z_dim, hidden), lambda i: (0, 0)),  # w1 (VMEM-resident)
                pl.BlockSpec((1, hidden), lambda i: (0, 0)),      # b1 (resident)
                pl.BlockSpec((hidden, xp), lambda i: (0, 0)),     # w2 (resident)
                pl.BlockSpec((1, xp), lambda i: (0, 0)),          # b2 (resident)
            ],
            out_specs=pl.BlockSpec((tm, xp), lambda i: (i, 0)),   # lane-dense output
        ),
        compiler_params=pltpu.CompilerParams(
            dimension_semantics=("parallel",),     # megacore-shard batch (v7x)
            vmem_limit_bytes=VMEM_LIMIT_BYTES,
        ),
        cost_estimate=pl.CostEstimate(
            flops=flops, transcendentals=0, bytes_accessed=bytes_accessed),
    )(z_in, w1_p, b1_p, w2_p, b2_p)

    out = out_padded if b_pad == B else out_padded[:B]
    return out if xp == x_dim else out[:, :x_dim]


if __name__ == "__main__":
    # Small shapes: batch=8, z_dim=16 (latent), x_dim=32 (reconstructed input).
    B, Z_DIM, X_DIM = 8, 16, 32
    key = jax.random.PRNGKey(0)
    kz, k1, k2, k3, k4 = jax.random.split(key, 5)

    # nn.Linear-style uniform init (weights stored transposed: (in, out)).
    s1 = 1.0 / jnp.sqrt(Z_DIM)
    s2 = 1.0 / jnp.sqrt(HIDDEN)
    w1 = jax.random.uniform(k1, (Z_DIM, HIDDEN), jnp.float32, -s1, s1)
    b1 = jax.random.uniform(k2, (HIDDEN,), jnp.float32, -s1, s1)
    w2 = jax.random.uniform(k3, (HIDDEN, X_DIM), jnp.float32, -s2, s2)
    b2 = jax.random.uniform(k4, (X_DIM,), jnp.float32, -s2, s2)
    z = jax.random.normal(kz, (B, Z_DIM), dtype=jnp.float32)

    # One-time parameter prep (outside the jitted forward).
    w1_p, b1_p, w2_p, b2_p, x_dim = prepare_decoder_params(w1, b1, w2, b2)

    img = decoder_forward(z, w1_p, b1_p, w2_p, b2_p, x_dim=x_dim)
    jax.block_until_ready(img)
    assert img.shape == (B, X_DIM)

    # Reference with matching bf16 matmul inputs / f32 accumulation.
    h_ref = jnp.maximum(
        jnp.dot(z.astype(jnp.bfloat16), w1.astype(jnp.bfloat16),
                preferred_element_type=jnp.float32) + b1[None, :], 0.0)
    ref_bf16 = jnp.dot(h_ref.astype(jnp.bfloat16), w2.astype(jnp.bfloat16),
                       preferred_element_type=jnp.float32) + b2[None, :]
    assert jnp.allclose(img, ref_bf16, atol=2e-3, rtol=2e-3)

    # Loose sanity check against the pure-f32 reference (bf16 rounding only).
    ref_f32 = jnp.maximum(z @ w1 + b1[None, :], 0.0) @ w2 + b2[None, :]
    assert jnp.allclose(img, ref_f32, atol=1e-1, rtol=1e-1)

    print("KERNEL_OK")
</pallas_src>

<mosaic_0001>
module attributes {stable_mosaic.version = 11 : i64} {
  func.func @decoder_kernel(%arg0: i32, %arg1: memref<8x16xf32, #tpu.memory_space<vmem>>, %arg2: memref<16x512xbf16, #tpu.memory_space<vmem>>, %arg3: memref<1x512xf32, #tpu.memory_space<vmem>>, %arg4: memref<512x128xbf16, #tpu.memory_space<vmem>>, %arg5: memref<1x128xf32, #tpu.memory_space<vmem>>, %arg6: memref<8x128xf32, #tpu.memory_space<vmem>>) attributes {dimension_semantics = [#tpu.dimension_semantics<parallel>], iteration_bounds = array<i64: 1>, scalar_prefetch = 0 : i64, scratch_operands = 0 : i64, tpu.core_type = #tpu.core_type<tc>, window_params = [{transform_indices = @transform_0, window_bounds = array<i64: 8, 16>}, {pipeline_mode = #tpu.pipeline_mode<synchronous>, transform_indices = @transform_1, window_bounds = array<i64: 16, 512>}, {pipeline_mode = #tpu.pipeline_mode<synchronous>, transform_indices = @transform_2, window_bounds = array<i64: 1, 512>}, {pipeline_mode = #tpu.pipeline_mode<synchronous>, transform_indices = @transform_3, window_bounds = array<i64: 512, 128>}, {pipeline_mode = #tpu.pipeline_mode<synchronous>, transform_indices = @transform_4, window_bounds = array<i64: 1, 128>}, {transform_indices = @transform_5, window_bounds = array<i64: 8, 128>}]} {
    %c0 = arith.constant 0 : index
    %c0_0 = arith.constant 0 : index
    %0 = vector.load %arg1[%c0, %c0_0] : memref<8x16xf32, #tpu.memory_space<vmem>>, vector<8x16xf32>
    %1 = arith.truncf %0 : vector<8x16xf32> to vector<8x16xbf16>
    %c0_1 = arith.constant 0 : index
    %c0_2 = arith.constant 0 : index
    %2 = vector.load %arg2[%c0_1, %c0_2] : memref<16x512xbf16, #tpu.memory_space<vmem>>, vector<16x512xbf16>
    %cst = arith.constant dense<0.000000e+00> : vector<8x512xf32>
    %3 = tpu.matmul %1, %2, %cst {dimension_numbers = #tpu.dot_dimension_numbers<[1], [0], [0], [1], [0, 0, 1, 1], [], []>} : vector<8x16xbf16>, vector<16x512xbf16>, vector<8x512xf32> -> vector<8x512xf32>
    %c0_3 = arith.constant 0 : index
    %c0_4 = arith.constant 0 : index
    %4 = vector.load %arg3[%c0_3, %c0_4] : memref<1x512xf32, #tpu.memory_space<vmem>>, vector<1x512xf32>
    %5 = vector.broadcast %4 : vector<1x512xf32> to vector<8x512xf32>
    %6 = arith.addf %3, %5 : vector<8x512xf32>
    %cst_5 = arith.constant 0.000000e+00 : f32
    %7 = vector.broadcast %cst_5 : f32 to vector<8x512xf32>
    %8 = arith.maximumf %6, %7 : vector<8x512xf32>
    %9 = arith.truncf %8 : vector<8x512xf32> to vector<8x512xbf16>
    %c0_6 = arith.constant 0 : index
    %c0_7 = arith.constant 0 : index
    %10 = vector.load %arg4[%c0_6, %c0_7] : memref<512x128xbf16, #tpu.memory_space<vmem>>, vector<512x128xbf16>
    %cst_8 = arith.constant dense<0.000000e+00> : vector<8x128xf32>
    %11 = tpu.matmul %9, %10, %cst_8 {dimension_numbers = #tpu.dot_dimension_numbers<[1], [0], [0], [1], [0, 0, 1, 1], [], []>} : vector<8x512xbf16>, vector<512x128xbf16>, vector<8x128xf32> -> vector<8x128xf32>
    %c0_9 = arith.constant 0 : index
    %c0_10 = arith.constant 0 : index
    %12 = vector.load %arg5[%c0_9, %c0_10] : memref<1x128xf32, #tpu.memory_space<vmem>>, vector<1x128xf32>
    %13 = vector.broadcast %12 : vector<1x128xf32> to vector<8x128xf32>
    %14 = arith.addf %11, %13 : vector<8x128xf32>
    %c0_11 = arith.constant 0 : index
    %c0_12 = arith.constant 0 : index
    %15 = vector.load %arg6[%c0_11, %c0_12] : memref<8x128xf32, #tpu.memory_space<vmem>>, vector<8x128xf32>
    tpu.vector_store %arg6[%c0_11, %c0_12], %14 {strides = array<i32>} : memref<8x128xf32, #tpu.memory_space<vmem>>, vector<8x128xf32>,
    return
  }
  func.func @transform_0(%arg0: i32) -> (i32, i32) {
    %c0_i32 = arith.constant 0 : i32
    %c0_i32_0 = arith.constant 0 : i32
    return %arg0, %c0_i32 : i32, i32
  }
  func.func @transform_1(%arg0: i32) -> (i32, i32) {
    %c0_i32 = arith.constant 0 : i32
    %c0_i32_0 = arith.constant 0 : i32
    %c0_i32_1 = arith.constant 0 : i32
    return %c0_i32, %c0_i32_0 : i32, i32
  }
  func.func @transform_2(%arg0: i32) -> (i32, i32) {
    %c0_i32 = arith.constant 0 : i32
    %c0_i32_0 = arith.constant 0 : i32
    %c0_i32_1 = arith.constant 0 : i32
    return %c0_i32, %c0_i32_0 : i32, i32
  }
  func.func @transform_3(%arg0: i32) -> (i32, i32) {
    %c0_i32 = arith.constant 0 : i32
    %c0_i32_0 = arith.constant 0 : i32
    %c0_i32_1 = arith.constant 0 : i32
    return %c0_i32, %c0_i32_0 : i32, i32
  }
  func.func @transform_4(%arg0: i32) -> (i32, i32) {
    %c0_i32 = arith.constant 0 : i32
    %c0_i32_0 = arith.constant 0 : i32
    %c0_i32_1 = arith.constant 0 : i32
    return %c0_i32, %c0_i32_0 : i32, i32
  }
  func.func @transform_5(%arg0: i32) -> (i32, i32) {
    %c0_i32 = arith.constant 0 : i32
    %c0_i32_0 = arith.constant 0 : i32
    return %arg0, %c0_i32 : i32, i32
  }
}

</mosaic_0001>

<llo_original>
// kernel: decoder_forward.1
$region0: #{decoder_forward.1}
  #allocation0 [shape = 'u32[]', space=smem, size = 0x4, offset = 0x4, fixed_abs, tag = 'smem constant byte address 0x4 - core index']
  #allocation1 [shape = 'u32[144,128]{1,0:T(1,128)}', space=vmem, size = 0x12000, scoped, tag = 'internal scratch']
  %s0 = inlined_call_operand.hbm [shape: f32[8,16], index: 0, kind: input, shape index: {}]
  %s1 = inlined_call_operand.hbm [shape: bf16[16,512], index: 1, kind: input, shape index: {}]
  %s2 = inlined_call_operand.vmem [shape: f32[1,512], index: 2, kind: input, shape index: {}]
  %s3 = inlined_call_operand.hbm [shape: bf16[512,128], index: 3, kind: input, shape index: {}]
  %s4 = inlined_call_operand.vmem [shape: f32[1,128], index: 4, kind: input, shape index: {}]
  %s5 = inlined_call_operand.hbm [shape: f32[8,128], index: 5, kind: output, shape index: {}]
  %s6 = sld [smem:[#allocation0]]
  $region42: #{decoder_forward.1} parent=0
    _
  %s8 = ssub.s32 1, %s6
  %s9 = scalar_select 0, %s8, %s6
  $region1: #{decoder_forward.1} parent=0
    #allocation2 [shape = 'u8[4096]{0}', space=vmem, size = 0x1000, scoped, tag = 'input window, operand 0, single buffered']
    #allocation3 [shape = 's32[1]{0}', space=sflag, size = 0x4, scoped, tag = 'scoped memory for decoder_forward.1']
    #allocation4 [shape = 's32[1]{0}', space=sflag, size = 0x4, scoped, tag = 'scoped memory for decoder_forward.1']
    #allocation5 [shape = 'u8[16384]{0}', space=vmem, size = 0x4000, scoped, tag = 'input window, operand 1, single buffered']
    #allocation6 [shape = 's32[1]{0}', space=sflag, size = 0x4, scoped, tag = 'scoped memory for decoder_forward.1']
    #allocation7 [shape = 'u8[131072]{0}', space=vmem, size = 0x20000, scoped, tag = 'input window, operand 3, single buffered']
    #allocation8 [shape = 'u8[4096]{0}', space=vmem, size = 0x1000, scoped, tag = 'output window, operand 0, single buffered']
    %10 = vsyncpa [#allocation3], 0
    %11 = vsyncpa [#allocation6], 0
    %12 = vsyncpa [#allocation4], 0
    // Predicated region
    $region2: #{decoder_forward.1} parent=1 // pred_check
      _
    $region3: #{decoder_forward.1} parent=1 // pred_check_branch
      %14 = sbr.rel (0) target = $region5
    $region4: #{decoder_forward.1} parent=1 // pred_region
      %s16 = ssub.s32 128, 128
      %17 = vsyncadd [#allocation3], %s16
      %s19 = sshll.u32 [#allocation2], 4
      %s20 = int_to_ptr.vmem [resolvable:$true] %s19
      %22 = dma.hbm_to_vmem [thread:$0]  %s0, 128, %s20, [#allocation3]
    $region5: #{decoder_forward.1} parent=1 // pred_fallthru
      _
    // Predicated region
    $region6: #{decoder_forward.1} parent=1 // pred_check
      _
    $region7: #{decoder_forward.1} parent=1 // pred_check_branch
      %24 = sbr.rel (0) target = $region9
    $region8: #{decoder_forward.1} parent=1 // pred_region
      %s26 = ssub.s32 512, 512
      %27 = vsyncadd [#allocation6], %s26
      %s28 = sshll.u32 [#allocation5], 4
      %s29 = int_to_ptr.vmem [resolvable:$true] %s28
      %34 = dma.hbm_to_vmem [thread:$0]  %s1, 512, %s29, [#allocation6], 256, 256, 16
    $region9: #{decoder_forward.1} parent=1 // pred_fallthru
      _
    // Predicated region
    $region10: #{decoder_forward.1} parent=1 // pred_check
      _
    $region11: #{decoder_forward.1} parent=1 // pred_check_branch
      %36 = sbr.rel (0) target = $region13
    $region12: #{decoder_forward.1} parent=1 // pred_region
      _
    $region13: #{decoder_forward.1} parent=1 // pred_fallthru
      _
    // Predicated region
    $region14: #{decoder_forward.1} parent=1 // pred_check
      _
    $region15: #{decoder_forward.1} parent=1 // pred_check_branch
      %38 = sbr.rel (0) target = $region17
    $region16: #{decoder_forward.1} parent=1 // pred_region
      %s40 = ssub.s32 4096, 4096
      %41 = vsyncadd [#allocation6], %s40
      %s42 = sshll.u32 [#allocation7], 4
      %s43 = int_to_ptr.vmem [resolvable:$true] %s42
      %48 = dma.hbm_to_vmem [thread:$0]  %s3, 4096, %s43, [#allocation6], 64, 64, 4
    $region17: #{decoder_forward.1} parent=1 // pred_fallthru
      _
    // Predicated region
    $region18: #{decoder_forward.1} parent=1 // pred_check
      _
    $region19: #{decoder_forward.1} parent=1 // pred_check_branch
      %50 = sbr.rel (0) target = $region21
    $region20: #{decoder_forward.1} parent=1 // pred_region
      _
    $region21: #{decoder_forward.1} parent=1 // pred_fallthru
      _
    // Predicated region
    $region22: #{decoder_forward.1} parent=1 // pred_check
      _
    $region23: #{decoder_forward.1} parent=1 // pred_check_branch
      %52 = sbr.rel (0) target = $region25
    $region24: #{decoder_forward.1} parent=1 // pred_region
      %53 = dma.done [#allocation3], 128
    $region25: #{decoder_forward.1} parent=1 // pred_fallthru
      _
    // Predicated region
    $region26: #{decoder_forward.1} parent=1 // pred_check
      _
    $region27: #{decoder_forward.1} parent=1 // pred_check_branch
      %55 = sbr.rel (0) target = $region29
    $region28: #{decoder_forward.1} parent=1 // pred_region
      %56 = dma.done [#allocation6], 512
    $region29: #{decoder_forward.1} parent=1 // pred_fallthru
      _
    // Predicated region
    $region30: #{decoder_forward.1} parent=1 // pred_check
      _
    $region31: #{decoder_forward.1} parent=1 // pred_check_branch
      %58 = sbr.rel (0) target = $region33
    $region32: #{decoder_forward.1} parent=1 // pred_region
      %59 = dma.done [#allocation6], 4096
    $region33: #{decoder_forward.1} parent=1 // pred_fallthru
      _
    %v61 = vld [vmem:[#allocation2] sm:$0xff]
    %v62 = vpack.c.bf16 %v61, %v61
    %v63 = vld [vmem:[#allocation5] sm:$0xff]
    %v64 = vld [vmem:[#allocation5 + $0x8] sm:$0xff]
    %v65 = vld [vmem:[#allocation5 + $0x10] sm:$0xff]
    %v66 = vld [vmem:[#allocation5 + $0x18] sm:$0xff]
    %v67 = vld [vmem:[%s2] sm:$0xf]
    %v69 = vlaneseq
    %v70 = vshrl.u32 %v69, 7
    %v71 = vsub.s32 0, %v70
    %v72 = vrot.slane %v67, %v71
    %v73 = vlaneseq
    %v74 = vshrl.u32 %v73, 7
    %v75 = vsub.s32 1, %v74
    %v76 = vrot.slane %v67, %v75
    %v77 = vlaneseq
    %v78 = vshrl.u32 %v77, 7
    %v79 = vsub.s32 2, %v78
    %v80 = vrot.slane %v67, %v79
    %v81 = vlaneseq
    %v82 = vshrl.u32 %v81, 7
    %v83 = vsub.s32 3, %v82
    %v84 = vrot.slane %v67, %v83
    %v93 = vunpack.c.l.b16 %v63
    %v94 = vunpack.c.h.b16 %v63
    %v95 = vunpack.c.l.b16 %v64
    %v96 = vunpack.c.h.b16 %v64
    %v97 = vunpack.c.l.b16 %v65
    %v98 = vunpack.c.h.b16 %v65
    %v99 = vunpack.c.l.b16 %v66
    %v100 = vunpack.c.h.b16 %v66
    %v101 = vpack.c.b16 %v97, %v93
    %v102 = vpack.c.b16 %v98, %v94
    %v103 = vpack.c.b16 %v99, %v95
    %v104 = vpack.c.b16 %v100, %v96
    %vm109 = vcmask 130048
    %v111 = vsel %vm109, %v62, 0
    %113 = vmatprep.subr.bf16.mxu0 %v102
    %114 = vmatpush1.bf16.msra.mxu0 %v101
    %115 = vmatprep.subr.bf16.mxu0 0
    %116 = vmatpush1.bf16.msra.mxu0 0
    %117 = vmatprep.subr.bf16.mxu0 0
    %118 = vmatpush1.bf16.msra.mxu0 0
    %119 = vmatprep.subr.bf16.mxu0 0
    %120 = vmatpush1.bf16.msra.mxu0 0
    %121 = vmatprep.subr.bf16.mxu0 0
    %122 = vmatpush1.bf16.msra.mxu0 0
    %123 = vmatprep.subr.bf16.mxu0 0
    %124 = vmatpush1.bf16.msra.mxu0 0
    %125 = vmatprep.subr.bf16.mxu0 0
    %126 = vmatpush1.bf16.msra.mxu0 0
    %127 = vmatprep.subr.bf16.mxu0 0
    %128 = vmatpush1.bf16.msra.mxu0 0
    %129 = vmatprep.subr.bf16.mxu0 0
    %130 = vmatpush1.bf16.msra.mxu0 0
    %131 = vmatprep.subr.bf16.mxu0 0
    %132 = vmatpush1.bf16.msra.mxu0 0
    %133 = vmatprep.subr.bf16.mxu0 0
    %134 = vmatpush1.bf16.msra.mxu0 0
    %135 = vmatprep.subr.bf16.mxu0 0
    %136 = vmatpush1.bf16.msra.mxu0 0
    %137 = vmatprep.subr.bf16.mxu0 0
    %138 = vmatpush1.bf16.msra.mxu0 0
    %139 = vmatprep.subr.bf16.mxu0 0
    %140 = vmatpush1.bf16.msra.mxu0 0
    %141 = vmatprep.subr.bf16.mxu0 0
    %142 = vmatpush1.bf16.msra.mxu0 0
    %143 = vmatprep.subr.bf16.mxu0 0
    %144 = vmatpush1.bf16.msra.mxu0 0
    %145 = vmatprep.mubr.bf16.mxu0 0
    %146 = vmatmul.mubr.bf16.gmra.mrb[0].mxu0 %v111
    %v147 = vpop.f32.mrb[0].mxu0
    %v148 = vadd.f32 %v72, %v147
    %v149 = vpop.f32.mrb[0].mxu0
    %v150 = vadd.f32 %v76, %v149
    %v151 = vpop.f32.mrb[0].mxu0
    %v152 = vpop.f32.mrb[0].mxu0
    %153 = vdwg.mxu0
    %154 = vmatprep.subr.bf16.mxu0 %v104
    %155 = vmatpush1.bf16.msra.mxu0 %v103
    %156 = vmatprep.subr.bf16.mxu0 0
    %157 = vmatpush1.bf16.msra.mxu0 0
    %158 = vmatprep.subr.bf16.mxu0 0
    %159 = vmatpush1.bf16.msra.mxu0 0
    %160 = vmatprep.subr.bf16.mxu0 0
    %161 = vmatpush1.bf16.msra.mxu0 0
    %162 = vmatprep.subr.bf16.mxu0 0
    %163 = vmatpush1.bf16.msra.mxu0 0
    %164 = vmatprep.subr.bf16.mxu0 0
    %165 = vmatpush1.bf16.msra.mxu0 0
    %166 = vmatprep.subr.bf16.mxu0 0
    %167 = vmatpush1.bf16.msra.mxu0 0
    %168 = vmatprep.subr.bf16.mxu0 0
    %169 = vmatpush1.bf16.msra.mxu0 0
    %170 = vmatprep.subr.bf16.mxu0 0
    %171 = vmatpush1.bf16.msra.mxu0 0
    %172 = vmatprep.subr.bf16.mxu0 0
    %173 = vmatpush1.bf16.msra.mxu0 0
    %174 = vmatprep.subr.bf16.mxu0 0
    %175 = vmatpush1.bf16.msra.mxu0 0
    %176 = vmatprep.subr.bf16.mxu0 0
    %177 = vmatpush1.bf16.msra.mxu0 0
    %178 = vmatprep.subr.bf16.mxu0 0
    %179 = vmatpush1.bf16.msra.mxu0 0
    %180 = vmatprep.subr.bf16.mxu0 0
    %181 = vmatpush1.bf16.msra.mxu0 0
    %182 = vmatprep.subr.bf16.mxu0 0
    %183 = vmatpush1.bf16.msra.mxu0 0
    %184 = vmatprep.subr.bf16.mxu0 0
    %185 = vmatpush1.bf16.msra.mxu0 0
    %186 = vmatprep.mubr.bf16.mxu0 0
    %187 = vmatmul.mubr.bf16.gmra.mrb[0].mxu0 %v111
    %v188 = vpop.f32.mrb[0].mxu0
    %v189 = vadd.f32 %v80, %v188
    %v190 = vpop.f32.mrb[0].mxu0
    %v191 = vadd.f32 %v84, %v190
    %v192 = vpop.f32.mrb[0].mxu0
    %v193 = vpop.f32.mrb[0].mxu0
    %194 = vdwg.mxu0
    %v195 = vmax.f32 %v148, 0.0
    %v196 = vmax.f32 %v150, 0.0
    %v197 = vmax.f32 %v189, 0.0
    %v198 = vmax.f32 %v191, 0.0
    %v199 = vpack.c.bf16 %v195, %v195
    %v200 = vpack.c.bf16 %v196, %v196
    %v201 = vpack.c.bf16 %v197, %v197
    %v202 = vpack.c.bf16 %v198, %v198
    %v203 = vld [vmem:[#allocation7] sm:$0xf]
    %v204 = vld [vmem:[#allocation7 + $0x4] sm:$0xf]
    %v205 = vld [vmem:[#allocation7 + $0x8] sm:$0xf]
    %v206 = vld [vmem:[#allocation7 + $0xc] sm:$0xf]
    %v207 = vld [vmem:[#allocation7 + $0x10] sm:$0xf]
    %v208 = vld [vmem:[#allocation7 + $0x14] sm:$0xf]
    %v209 = vld [vmem:[#allocation7 + $0x18] sm:$0xf]
    %v210 = vld [vmem:[#allocation7 + $0x1c] sm:$0xf]
    %v211 = vld [vmem:[#allocation7 + $0x20] sm:$0xf]
    %v212 = vld [vmem:[#allocation7 + $0x24] sm:$0xf]
    %v213 = vld [vmem:[#allocation7 + $0x28] sm:$0xf]
    %v214 = vld [vmem:[#allocation7 + $0x2c] sm:$0xf]
    %v215 = vld [vmem:[#allocation7 + $0x30] sm:$0xf]
    %v216 = vld [vmem:[#allocation7 + $0x34] sm:$0xf]
    %v217 = vld [vmem:[#allocation7 + $0x38] sm:$0xf]
    %v218 = vld [vmem:[#allocation7 + $0x3c] sm:$0xf]
    %v219 = vld [vmem:[#allocation7 + $0x40] sm:$0xf]
    %v220 = vld [vmem:[#allocation7 + $0x44] sm:$0xf]
    %v221 = vld [vmem:[#allocation7 + $0x48] sm:$0xf]
    %v222 = vld [vmem:[#allocation7 + $0x4c] sm:$0xf]
    %v223 = vld [vmem:[#allocation7 + $0x50] sm:$0xf]
    %v224 = vld [vmem:[#allocation7 + $0x54] sm:$0xf]
    %v225 = vld [vmem:[#allocation7 + $0x58] sm:$0xf]
    %v226 = vld [vmem:[#allocation7 + $0x5c] sm:$0xf]
    %v227 = vld [vmem:[#allocation7 + $0x60] sm:$0xf]
    %v228 = vld [vmem:[#allocation7 + $0x64] sm:$0xf]
    %v229 = vld [vmem:[#allocation7 + $0x68] sm:$0xf]
    %v230 = vld [vmem:[#allocation7 + $0x6c] sm:$0xf]
    %v231 = vld [vmem:[#allocation7 + $0x70] sm:$0xf]
    %v232 = vld [vmem:[#allocation7 + $0x74] sm:$0xf]
    %v233 = vld [vmem:[#allocation7 + $0x78] sm:$0xf]
    %v234 = vld [vmem:[#allocation7 + $0x7c] sm:$0xf]
    %v235 = vld [vmem:[#allocation7 + $0x80] sm:$0xf]
    %v236 = vld [vmem:[#allocation7 + $0x84] sm:$0xf]
    %v237 = vld [vmem:[#allocation7 + $0x88] sm:$0xf]
    %v238 = vld [vmem:[#allocation7 + $0x8c] sm:$0xf]
    %v239 = vld [vmem:[#allocation7 + $0x90] sm:$0xf]
    %v240 = vld [vmem:[#allocation7 + $0x94] sm:$0xf]
    %v241 = vld [vmem:[#allocation7 + $0x98] sm:$0xf]
    %v242 = vld [vmem:[#allocation7 + $0x9c] sm:$0xf]
    %v243 = vld [vmem:[#allocation7 + $0xa0] sm:$0xf]
    %v244 = vld [vmem:[#allocation7 + $0xa4] sm:$0xf]
    %v245 = vld [vmem:[#allocation7 + $0xa8] sm:$0xf]
    %v246 = vld [vmem:[#allocation7 + $0xac] sm:$0xf]
    %v247 = vld [vmem:[#allocation7 + $0xb0] sm:$0xf]
    %v248 = vld [vmem:[#allocation7 + $0xb4] sm:$0xf]
    %v249 = vld [vmem:[#allocation7 + $0xb8] sm:$0xf]
    %v250 = vld [vmem:[#allocation7 + $0xbc] sm:$0xf]
    %v251 = vld [vmem:[#allocation7 + $0xc0] sm:$0xf]
    %v252 = vld [vmem:[#allocation7 + $0xc4] sm:$0xf]
    %v253 = vld [vmem:[#allocation7 + $0xc8] sm:$0xf]
    %v254 = vld [vmem:[#allocation7 + $0xcc] sm:$0xf]
    %v255 = vld [vmem:[#allocation7 + $0xd0] sm:$0xf]
    %v256 = vld [vmem:[#allocation7 + $0xd4] sm:$0xf]
    %v257 = vld [vmem:[#allocation7 + $0xd8] sm:$0xf]
    %v258 = vld [vmem:[#allocation7 + $0xdc] sm:$0xf]
    %v259 = vld [vmem:[#allocation7 + $0xe0] sm:$0xf]
    %v260 = vld [vmem:[#allocation7 + $0xe4] sm:$0xf]
    %v261 = vld [vmem:[#allocation7 + $0xe8] sm:$0xf]
    %v262 = vld [vmem:[#allocation7 + $0xec] sm:$0xf]
    %v263 = vld [vmem:[#allocation7 + $0xf0] sm:$0xf]
    %v264 = vld [vmem:[#allocation7 + $0xf4] sm:$0xf]
    %v265 = vld [vmem:[#allocation7 + $0xf8] sm:$0xf]
    %v266 = vld [vmem:[#allocation7 + $0xfc] sm:$0xf]
    %v267 = vld [vmem:[%s4] sm:$0x1]
    %v269 = vlaneseq
    %v270 = vshrl.u32 %v269, 7
    %v271 = vsub.s32 0, %v270
    %v272 = vrot.slane %v267, %v271
    %v338 = vunpack.c.l.b16 %v203
    %v339 = vunpack.c.l.b16 %v204
    %v340 = vunpack.c.l.b16 %v205
    %v341 = vunpack.c.l.b16 %v206
    %v342 = vunpack.c.l.b16 %v207
    %v343 = vunpack.c.l.b16 %v208
    %v344 = vunpack.c.l.b16 %v209
    %v345 = vunpack.c.l.b16 %v210
    %v346 = vunpack.c.l.b16 %v211
    %v347 = vunpack.c.l.b16 %v212
    %v348 = vunpack.c.l.b16 %v213
    %v349 = vunpack.c.l.b16 %v214
    %v350 = vunpack.c.l.b16 %v215
    %v351 = vunpack.c.l.b16 %v216
    %v352 = vunpack.c.l.b16 %v217
    %v353 = vunpack.c.l.b16 %v218
    %v354 = vunpack.c.l.b16 %v219
    %v355 = vunpack.c.l.b16 %v220
    %v356 = vunpack.c.l.b16 %v221
    %v357 = vunpack.c.l.b16 %v222
    %v358 = vunpack.c.l.b16 %v223
    %v359 = vunpack.c.l.b16 %v224
    %v360 = vunpack.c.l.b16 %v225
    %v361 = vunpack.c.l.b16 %v226
    %v362 = vunpack.c.l.b16 %v227
    %v363 = vunpack.c.l.b16 %v228
    %v364 = vunpack.c.l.b16 %v229
    %v365 = vunpack.c.l.b16 %v230
    %v366 = vunpack.c.l.b16 %v231
    %v367 = vunpack.c.l.b16 %v232
    %v368 = vunpack.c.l.b16 %v233
    %v369 = vunpack.c.l.b16 %v234
    %v370 = vunpack.c.l.b16 %v235
    %v371 = vunpack.c.l.b16 %v236
    %v372 = vunpack.c.l.b16 %v237
    %v373 = vunpack.c.l.b16 %v238
    %v374 = vunpack.c.l.b16 %v239
    %v375 = vunpack.c.l.b16 %v240
    %v376 = vunpack.c.l.b16 %v241
    %v377 = vunpack.c.l.b16 %v242
    %v378 = vunpack.c.l.b16 %v243
    %v379 = vunpack.c.l.b16 %v244
    %v380 = vunpack.c.l.b16 %v245
    %v381 = vunpack.c.l.b16 %v246
    %v382 = vunpack.c.l.b16 %v247
    %v383 = vunpack.c.l.b16 %v248
    %v384 = vunpack.c.l.b16 %v249
    %v385 = vunpack.c.l.b16 %v250
    %v386 = vunpack.c.l.b16 %v251
    %v387 = vunpack.c.l.b16 %v252
    %v388 = vunpack.c.l.b16 %v253
    %v389 = vunpack.c.l.b16 %v254
    %v390 = vunpack.c.l.b16 %v255
    %v391 = vunpack.c.l.b16 %v256
    %v392 = vunpack.c.l.b16 %v257
    %v393 = vunpack.c.l.b16 %v258
    %v394 = vunpack.c.l.b16 %v259
    %v395 = vunpack.c.l.b16 %v260
    %v396 = vunpack.c.l.b16 %v261
    %v397 = vunpack.c.l.b16 %v262
    %v398 = vunpack.c.l.b16 %v263
    %v399 = vunpack.c.l.b16 %v264
    %v400 = vunpack.c.l.b16 %v265
    %v401 = vunpack.c.l.b16 %v266
    %v402 = vpack.c.b16 %v339, %v338
    %v403 = vpack.c.b16 %v341, %v340
    %v404 = vpack.c.b16 %v343, %v342
    %v405 = vpack.c.b16 %v345, %v344
    %v406 = vpack.c.b16 %v347, %v346
    %v407 = vpack.c.b16 %v349, %v348
    %v408 = vpack.c.b16 %v351, %v350
    %v409 = vpack.c.b16 %v353, %v352
    %v410 = vpack.c.b16 %v355, %v354
    %v411 = vpack.c.b16 %v357, %v356
    %v412 = vpack.c.b16 %v359, %v358
    %v413 = vpack.c.b16 %v361, %v360
    %v414 = vpack.c.b16 %v363, %v362
    %v415 = vpack.c.b16 %v365, %v364
    %v416 = vpack.c.b16 %v367, %v366
    %v417 = vpack.c.b16 %v369, %v368
    %v418 = vpack.c.b16 %v371, %v370
    %v419 = vpack.c.b16 %v373, %v372
    %v420 = vpack.c.b16 %v375, %v374
    %v421 = vpack.c.b16 %v377, %v376
    %v422 = vpack.c.b16 %v379, %v378
    %v423 = vpack.c.b16 %v381, %v380
    %v424 = vpack.c.b16 %v383, %v382
    %v425 = vpack.c.b16 %v385, %v384
    %v426 = vpack.c.b16 %v387, %v386
    %v427 = vpack.c.b16 %v389, %v388
    %v428 = vpack.c.b16 %v391, %v390
    %v429 = vpack.c.b16 %v393, %v392
    %v430 = vpack.c.b16 %v395, %v394
    %v431 = vpack.c.b16 %v397, %v396
    %v432 = vpack.c.b16 %v399, %v398
    %v433 = vpack.c.b16 %v401, %v400
    %466 = vmatprep.subr.bf16.mxu0 0
    %467 = vmatpush1.bf16.msra.mxu0 %v402
    %468 = vmatprep.subr.bf16.mxu0 0
    %469 = vmatpush1.bf16.msra.mxu0 %v403
    %470 = vmatprep.subr.bf16.mxu0 0
    %471 = vmatpush1.bf16.msra.mxu0 %v404
    %472 = vmatprep.subr.bf16.mxu0 0
    %473 = vmatpush1.bf16.msra.mxu0 %v405
    %474 = vmatprep.subr.bf16.mxu0 0
    %475 = vmatpush1.bf16.msra.mxu0 %v406
    %476 = vmatprep.subr.bf16.mxu0 0
    %477 = vmatpush1.bf16.msra.mxu0 %v407
    %478 = vmatprep.subr.bf16.mxu0 0
    %479 = vmatpush1.bf16.msra.mxu0 %v408
    %480 = vmatprep.subr.bf16.mxu0 0
    %481 = vmatpush1.bf16.msra.mxu0 %v409
    %482 = vmatprep.subr.bf16.mxu0 0
    %483 = vmatpush1.bf16.msra.mxu0 %v410
    %484 = vmatprep.subr.bf16.mxu0 0
    %485 = vmatpush1.bf16.msra.mxu0 %v411
    %486 = vmatprep.subr.bf16.mxu0 0
    %487 = vmatpush1.bf16.msra.mxu0 %v412
    %488 = vmatprep.subr.bf16.mxu0 0
    %489 = vmatpush1.bf16.msra.mxu0 %v413
    %490 = vmatprep.subr.bf16.mxu0 0
    %491 = vmatpush1.bf16.msra.mxu0 %v414
    %492 = vmatprep.subr.bf16.mxu0 0
    %493 = vmatpush1.bf16.msra.mxu0 %v415
    %494 = vmatprep.subr.bf16.mxu0 0
    %495 = vmatpush1.bf16.msra.mxu0 %v416
    %496 = vmatprep.subr.bf16.mxu0 0
    %497 = vmatpush1.bf16.msra.mxu0 %v417
    %498 = vmatprep.mubr.bf16.mxu0 %v200
    %499 = vmatmul.mubr.bf16.gmra.mrb[0].mxu0 %v199
    %v500 = vpop.f32.mrb[0].mxu0
    %v501 = vadd.f32 %v272, %v500
    %v502 = vpop.f32.mrb[0].mxu0
    %v503 = vpop.f32.mrb[0].mxu0
    %v504 = vpop.f32.mrb[0].mxu0
    %505 = vdwg.mxu0
    %506 = vmatprep.subr.bf16.mxu0 0
    %507 = vmatpush1.bf16.msra.mxu0 %v418
    %508 = vmatprep.subr.bf16.mxu0 0
    %509 = vmatpush1.bf16.msra.mxu0 %v419
    %510 = vmatprep.subr.bf16.mxu0 0
    %511 = vmatpush1.bf16.msra.mxu0 %v420
    %512 = vmatprep.subr.bf16.mxu0 0
    %513 = vmatpush1.bf16.msra.mxu0 %v421
    %514 = vmatprep.subr.bf16.mxu0 0
    %515 = vmatpush1.bf16.msra.mxu0 %v422
    %516 = vmatprep.subr.bf16.mxu0 0
    %517 = vmatpush1.bf16.msra.mxu0 %v423
    %518 = vmatprep.subr.bf16.mxu0 0
    %519 = vmatpush1.bf16.msra.mxu0 %v424
    %520 = vmatprep.subr.bf16.mxu0 0
    %521 = vmatpush1.bf16.msra.mxu0 %v425
    %522 = vmatprep.subr.bf16.mxu0 0
    %523 = vmatpush1.bf16.msra.mxu0 %v426
    %524 = vmatprep.subr.bf16.mxu0 0
    %525 = vmatpush1.bf16.msra.mxu0 %v427
    %526 = vmatprep.subr.bf16.mxu0 0
    %527 = vmatpush1.bf16.msra.mxu0 %v428
    %528 = vmatprep.subr.bf16.mxu0 0
    %529 = vmatpush1.bf16.msra.mxu0 %v429
    %530 = vmatprep.subr.bf16.mxu0 0
    %531 = vmatpush1.bf16.msra.mxu0 %v430
    %532 = vmatprep.subr.bf16.mxu0 0
    %533 = vmatpush1.bf16.msra.mxu0 %v431
    %534 = vmatprep.subr.bf16.mxu0 0
    %535 = vmatpush1.bf16.msra.mxu0 %v432
    %536 = vmatprep.subr.bf16.mxu0 0
    %537 = vmatpush1.bf16.msra.mxu0 %v433
    %538 = vmatprep.mubr.bf16.mxu0 %v202
    %539 = vmatmul.mubr.bf16.gmra.mrb[0].mxu0 %v201
    %v540 = vpop.f32.mrb[0].mxu0
    %v541 = vadd.f32 %v501, %v540
    %v542 = vpop.f32.mrb[0].mxu0
    %v543 = vpop.f32.mrb[0].mxu0
    %v544 = vpop.f32.mrb[0].mxu0
    %545 = vdwg.mxu0
    %546 = vst [vmem:[#allocation8] sm:$0xff] %v541
    // Predicated region
    $region34: #{decoder_forward.1} parent=1 // pred_check
      _
    $region35: #{decoder_forward.1} parent=1 // pred_check_branch
      %548 = sbr.rel (0) target = $region37
    $region36: #{decoder_forward.1} parent=1 // pred_region
      %s550 = ssub.s32 128, 128
      %551 = vsyncadd [#allocation4], %s550
      %s553 = sshll.u32 [#allocation8], 4
      %s554 = int_to_ptr.vmem [resolvable:$true] %s553
      %556 = dma.vmem_to_hbm [thread:$0]  %s554, 128, %s5, [#allocation4]
    $region37: #{decoder_forward.1} parent=1 // pred_fallthru
      _
    // Predicated region
    $region38: #{decoder_forward.1} parent=1 // pred_check
      _
    $region39: #{decoder_forward.1} parent=1 // pred_check_branch
      %558 = sbr.rel (0) target = $region41
    $region40: #{decoder_forward.1} parent=1 // pred_region
      %559 = dma.done [#allocation4], 128
    $region41: #{decoder_forward.1} parent=1 // pred_fallthru
      _
    %560 = vsyncpa [#allocation3], 1
    %561 = vsyncpa [#allocation6], 1
    %562 = vsyncpa [#allocation4], 1

</llo_original>
